<compile_context>
chip_gen: v7x
topology: tpu7x:2x2x1
jax: 0.10.0
libtpu: 0.0.40
codegen_flags: <defaults>
</compile_context>

<pallas_src>
import functools

import jax
import jax.numpy as jnp
from jax.experimental import pallas as pl
from jax.experimental.pallas import tpu as pltpu


_TR_MAX = 512    # row tile (N*C axis); multiple of 8/16/32 sublanes for any dtype
_TK_MAX = 2048   # reduction tile (H*W axis); multiple of 128 lanes


def _round_up(x, m):
    return ((x + m - 1) // m) * m


def _gap_kernel(x_ref, o_ref, acc_ref, *, hw, tk, inv_hw, needs_mask):
    """Accumulate per-row sums of one (TR, TK) tile into a (TR, 1) f32 scratch."""
    k = pl.program_id(1)

    @pl.when(k == 0)
    def _init():
        acc_ref[...] = jnp.zeros_like(acc_ref)

    x = x_ref[...].astype(jnp.float32)            # (TR, TK), accumulate in f32
    if needs_mask:
        # Only emitted when H*W is not a multiple of the k-tile: zero the
        # out-of-bounds (clipped) lanes of the boundary block.
        col = k * tk + jax.lax.broadcasted_iota(jnp.int32, (1, tk), 1)
        x = jnp.where(col < hw, x, 0.0)

    acc_ref[...] += jnp.sum(x, axis=-1, keepdims=True)

    @pl.when(k == pl.num_programs(1) - 1)
    def _finalize():
        o_ref[...] = (acc_ref[...] * inv_hw).astype(o_ref.dtype)


def global_avg_pool2d(x):
    """adaptive_avg_pool2d(x, 1).view(N, -1): (N, C, H, W) -> (N, C)."""
    n, c, h, w = x.shape
    nc, hw = n * c, h * w
    itemsize = jnp.dtype(x.dtype).itemsize

    # Contiguous NCHW -> (N*C, H*W): pure reshape, no data movement / padding.
    x2 = x.reshape(nc, hw)

    # Row tile: full extent if small (always a legal block dim), else 512.
    tr = nc if nc <= _TR_MAX else _TR_MAX
    # Reduction tile: full extent if it fits (no masking needed), else a
    # lane-aligned max tile with in-kernel masking of the ragged tail.
    if hw <= _TK_MAX:
        tk, needs_mask = hw, False
    else:
        tk, needs_mask = _TK_MAX, (hw % _TK_MAX != 0)

    grid = (pl.cdiv(nc, tr), pl.cdiv(hw, tk))

    kernel = functools.partial(
        _gap_kernel, hw=hw, tk=tk, inv_hw=1.0 / float(hw), needs_mask=needs_mask)

    # VMEM budget (lane/sublane-padded): double-buffered input tile + f32
    # accumulator + double-buffered output block.
    tr_pad = _round_up(tr, 32)
    tk_pad = _round_up(tk, 128)
    need = (2 * tr_pad * tk_pad * itemsize
            + tr_pad * 128 * 4
            + 2 * tr_pad * 128 * itemsize)
    vmem_limit = int(min(max(2 * need, 16 * 1024 * 1024), 40 * 1024 * 1024))

    cost = pl.CostEstimate(
        flops=int(nc) * int(hw),
        transcendentals=0,
        bytes_accessed=int(nc) * int(hw) * itemsize + int(nc) * itemsize,
    )

    out = pl.pallas_call(
        kernel,
        out_shape=jax.ShapeDtypeStruct((nc, 1), x.dtype),
        grid_spec=pltpu.PrefetchScalarGridSpec(
            num_scalar_prefetch=0,
            grid=grid,
            in_specs=[pl.BlockSpec((tr, tk), lambda i, k: (i, k))],
            out_specs=pl.BlockSpec((tr, 1), lambda i, k: (i, 0)),
            scratch_shapes=[pltpu.VMEM((tr, 1), jnp.float32)],
        ),
        compiler_params=pltpu.CompilerParams(
            dimension_semantics=("parallel", "arbitrary"),
            vmem_limit_bytes=vmem_limit,
        ),
        cost_estimate=cost,
    )(x2)

    return out[:, 0].reshape(n, c)


if __name__ == "__main__":
    key = jax.random.PRNGKey(0)
    # Small NCHW input consistent with the module's forward.
    x = jax.random.normal(key, (2, 4, 16, 16), dtype=jnp.float32)

    y = global_avg_pool2d(x)
    jax.block_until_ready(y)

    # Sanity check against pure-JAX reference (mean over spatial dims).
    y_ref = jnp.mean(x, axis=(2, 3))
    assert y.shape == (2, 4), y.shape
    assert jnp.allclose(y, y_ref, atol=1e-5, rtol=1e-5), "mismatch vs reference"

    print("KERNEL_OK")
</pallas_src>

<mosaic_0001>
module attributes {stable_mosaic.version = 11 : i64} {
  func.func @_gap_kernel(%arg0: i32, %arg1: i32, %arg2: memref<8x256xf32, #tpu.memory_space<vmem>>, %arg3: memref<8x1xf32, #tpu.memory_space<vmem>>, %arg4: memref<8x1xf32, #tpu.memory_space<vmem>>) attributes {dimension_semantics = [#tpu.dimension_semantics<parallel>, #tpu.dimension_semantics<arbitrary>], iteration_bounds = array<i64: 1, 1>, scalar_prefetch = 0 : i64, scratch_operands = 1 : i64, tpu.core_type = #tpu.core_type<tc>, window_params = [{transform_indices = @transform_0, window_bounds = array<i64: 8, 256>}, {transform_indices = @transform_1, window_bounds = array<i64: 8, 1>}]} {
    %c0_i32 = arith.constant 0 : i32
    %0 = arith.cmpi eq, %arg1, %c0_i32 : i32
    %1 = arith.extui %0 : i1 to i32
    %c0_i32_0 = arith.constant 0 : i32
    %2 = arith.cmpi ne, %1, %c0_i32_0 : i32
    scf.if %2 {
      %cst_8 = arith.constant 0.000000e+00 : f32
      %12 = vector.broadcast %cst_8 : f32 to vector<8x1xf32>
      %c0_9 = arith.constant 0 : index
      %c0_10 = arith.constant 0 : index
      %13 = vector.load %arg4[%c0_9, %c0_10] : memref<8x1xf32, #tpu.memory_space<vmem>>, vector<8x1xf32>
      tpu.vector_store %arg4[%c0_9, %c0_10], %12 {strides = array<i32>} : memref<8x1xf32, #tpu.memory_space<vmem>>, vector<8x1xf32>,
    } else {
    }
    %c0 = arith.constant 0 : index
    %c0_1 = arith.constant 0 : index
    %3 = vector.load %arg2[%c0, %c0_1] : memref<8x256xf32, #tpu.memory_space<vmem>>, vector<8x256xf32>
    %c0_2 = arith.constant 0 : index
    %c0_3 = arith.constant 0 : index
    %4 = vector.load %arg4[%c0_2, %c0_3] : memref<8x1xf32, #tpu.memory_space<vmem>>, vector<8x1xf32>
    %cst = arith.constant dense<0.000000e+00> : vector<8xf32>
    %5 = vector.multi_reduction <add>, %3, %cst [1] : vector<8x256xf32> to vector<8xf32>
    %6 = vector.shape_cast %5 : vector<8xf32> to vector<8x1xf32>
    %7 = arith.addf %4, %6 : vector<8x1xf32>
    %c0_4 = arith.constant 0 : index
    %c0_5 = arith.constant 0 : index
    %8 = vector.load %arg4[%c0_4, %c0_5] : memref<8x1xf32, #tpu.memory_space<vmem>>, vector<8x1xf32>
    tpu.vector_store %arg4[%c0_4, %c0_5], %7 {strides = array<i32>} : memref<8x1xf32, #tpu.memory_space<vmem>>, vector<8x1xf32>,
    %c0_i32_6 = arith.constant 0 : i32
    %9 = arith.cmpi eq, %arg1, %c0_i32_6 : i32
    %10 = arith.extui %9 : i1 to i32
    %c0_i32_7 = arith.constant 0 : i32
    %11 = arith.cmpi ne, %10, %c0_i32_7 : i32
    scf.if %11 {
      %c0_8 = arith.constant 0 : index
      %c0_9 = arith.constant 0 : index
      %12 = vector.load %arg4[%c0_8, %c0_9] : memref<8x1xf32, #tpu.memory_space<vmem>>, vector<8x1xf32>
      %cst_10 = arith.constant 3.906250e-03 : f32
      %13 = vector.broadcast %cst_10 : f32 to vector<8x1xf32>
      %14 = arith.mulf %12, %13 : vector<8x1xf32>
      %c0_11 = arith.constant 0 : index
      %c0_12 = arith.constant 0 : index
      %15 = vector.load %arg3[%c0_11, %c0_12] : memref<8x1xf32, #tpu.memory_space<vmem>>, vector<8x1xf32>
      tpu.vector_store %arg3[%c0_11, %c0_12], %14 {strides = array<i32>} : memref<8x1xf32, #tpu.memory_space<vmem>>, vector<8x1xf32>,
    } else {
    }
    return
  }
  func.func @transform_0(%arg0: i32, %arg1: i32) -> (i32, i32) {
    %c0_i32 = arith.constant 0 : i32
    return %arg0, %arg1 : i32, i32
  }
  func.func @transform_1(%arg0: i32, %arg1: i32) -> (i32, i32) {
    %c0_i32 = arith.constant 0 : i32
    %c0_i32_0 = arith.constant 0 : i32
    return %arg0, %c0_i32 : i32, i32
  }
}

</mosaic_0001>

<llo_original>
// kernel: tpu_custom_call.1
$region0: #{tpu_custom_call.1}
  #allocation0 [shape = 'u32[]', space=smem, size = 0x4, offset = 0x4, fixed_abs, tag = 'smem constant byte address 0x4 - core index']
  #allocation1 [shape = 'u32[144,128]{1,0:T(1,128)}', space=vmem, size = 0x12000, scoped, tag = 'internal scratch']
  #allocation2 [shape = 'f32[8,1]{1,0:T(8,128)}', space=vmem, size = 0x1000, scoped, tag = 'scratch operand']
  %s0 = inlined_call_operand.hbm [shape: f32[8,256], index: 0, kind: input, shape index: {}]
  %s1 = inlined_call_operand.vmem [shape: f32[8,1], index: 1, kind: output, shape index: {}]
  %s2 = sld [smem:[#allocation0]]
  $region26: #{tpu_custom_call.1} parent=0
    _
  %s4 = ssub.s32 1, %s2
  %s5 = scalar_select 0, %s4, %s2
  $region1: #{tpu_custom_call.1} parent=0
    #allocation3 [shape = 'u8[8192]{0}', space=vmem, size = 0x2000, scoped, tag = 'input window, operand 0, single buffered']
    #allocation4 [shape = 's32[1]{0}', space=sflag, size = 0x4, scoped, tag = 'scoped memory for tpu_custom_call.1']
    %6 = vsyncpa [#allocation4], 0
    // Predicated region
    $region2: #{tpu_custom_call.1} parent=1 // pred_check
      _
    $region3: #{tpu_custom_call.1} parent=1 // pred_check_branch
      %8 = sbr.rel (0) target = $region5
    $region4: #{tpu_custom_call.1} parent=1 // pred_region
      %s10 = ssub.s32 256, 256
      %11 = vsyncadd [#allocation4], %s10
      %s13 = sshll.u32 [#allocation3], 4
      %s14 = int_to_ptr.vmem [resolvable:$true] %s13
      %16 = dma.hbm_to_vmem [thread:$0]  %s0, 256, %s14, [#allocation4]
    $region5: #{tpu_custom_call.1} parent=1 // pred_fallthru
      _
    // Predicated region
    $region6: #{tpu_custom_call.1} parent=1 // pred_check
      _
    $region7: #{tpu_custom_call.1} parent=1 // pred_check_branch
      %18 = sbr.rel (0) target = $region9
    $region8: #{tpu_custom_call.1} parent=1 // pred_region
      %19 = dma.done [#allocation4], 256
    $region9: #{tpu_custom_call.1} parent=1 // pred_fallthru
      _
    %p20 = scmp.eq.s32.totalorder 0, 0
    // Predicated region
    $region10: #{tpu_custom_call.1} parent=1 // pred_check
      %p21 = pneg %p20
    $region11: #{tpu_custom_call.1} parent=1 // pred_check_branch
      %23 = sbr.rel (%p21) target = $region13
    $region12: #{tpu_custom_call.1} parent=1 // pred_region
      %vm24 = vcmask 7168
      %25 = vst.msk [vmem:[#allocation2] sm:$0xff] %vm24, 0.0
    $region13: #{tpu_custom_call.1} parent=1 // pred_fallthru
      _
    %v26 = vld [vmem:[#allocation3] sm:$0xff]
    %v27 = vld [vmem:[#allocation3 + $0x8] sm:$0xff]
    %v28 = vld [vmem:[#allocation2] sm:$0xff]
    %v29 = vadd.f32 %v26, %v27
    %30 = vadd.xlane.f32.xlu0 %v29
    %v31 = vpop.xlane.xlu0 %30
    %v32 = vadd.f32 %v28, %v31
    %vm33 = vcmask 7168
    %34 = vst.msk [vmem:[#allocation2] sm:$0xff] %vm33, %v32
    // Predicated region
    $region14: #{tpu_custom_call.1} parent=1 // pred_check
      %p35 = pneg %p20
    $region15: #{tpu_custom_call.1} parent=1 // pred_check_branch
      %37 = sbr.rel (%p35) target = $region17
    $region16: #{tpu_custom_call.1} parent=1 // pred_region
      %v38 = vld [vmem:[#allocation2] sm:$0xff]
      %v39 = vmul.f32 %v38, 0.00390625
      %40 = vst.msk [vmem:[%s1] sm:$0xff] %vm33, %v39
    $region17: #{tpu_custom_call.1} parent=1 // pred_fallthru
      _
    // Predicated region
    $region18: #{tpu_custom_call.1} parent=1 // pred_check
      _
    $region19: #{tpu_custom_call.1} parent=1 // pred_check_branch
      %42 = sbr.rel (0) target = $region21
    $region20: #{tpu_custom_call.1} parent=1 // pred_region
      _
    $region21: #{tpu_custom_call.1} parent=1 // pred_fallthru
      _
    // Predicated region
    $region22: #{tpu_custom_call.1} parent=1 // pred_check
      _
    $region23: #{tpu_custom_call.1} parent=1 // pred_check_branch
      %44 = sbr.rel (0) target = $region25
    $region24: #{tpu_custom_call.1} parent=1 // pred_region
      _
    $region25: #{tpu_custom_call.1} parent=1 // pred_fallthru
      _
    %45 = vsyncpa [#allocation4], 1

</llo_original>
